<compile_context>
chip_gen: v6e
topology: v6e:2x2x1
jax: 0.10.0
libtpu: 0.0.40
codegen_flags: <defaults>
</compile_context>

<pallas_src>
import jax
import jax.numpy as jnp
import numpy as np
from jax.experimental import pallas as pl
from jax.experimental.pallas import tpu as pltpu


def imaginarium_kernel(x_img_ref, x_txt_ref, y_ref,
                       w1b_ref, b1_ref, w2t_ref, b2_ref,
                       tile_ref, gsum_ref, card_id_ref, negm_ref,
                       out_ref):
    x_img = x_img_ref[...]                       # (bt, C*E)  lane-dense
    x_txt = x_txt_ref[...]                       # (bt, W*E)  lane-dense
    y = y_ref[...]                               # (bt, C)

    bt, C = y.shape
    W = out_ref.shape[1]

    # ---- index_chose_img = argmax(y, dim=1): first index wins on ties ------
    col = jax.lax.broadcasted_iota(jnp.int32, (bt, C), 1)
    ymax = jnp.max(y, axis=1, keepdims=True)
    cand = jnp.where(y == ymax, col, C)
    idx = jnp.min(cand, axis=1, keepdims=True)                    # (bt, 1)

    # ---- leader gather fused with linear_img1 -------------------------------
    # card_mask selects the E lanes of the chosen card in the flattened row;
    # the gather reduction rides the MXU inside the first linear via w1_block.
    card_mask = (card_id_ref[...] == idx).astype(x_img.dtype)     # (bt, C*E)
    masked = x_img * card_mask                                    # (bt, C*E)
    h = jnp.dot(masked, w1b_ref[...],
                preferred_element_type=jnp.float32) + b1_ref[...]  # (bt, D)

    # ---- Softmax over the feature dim (approx reciprocal on the EUP) --------
    hm = jnp.max(h, axis=-1, keepdims=True)
    he = jnp.exp(h - hm)
    h = he * pl.reciprocal(jnp.sum(he, axis=-1, keepdims=True), approx=True)

    # ---- linear_img2 ---------------------------------------------------------
    leader = jnp.dot(h, w2t_ref[...],
                     preferred_element_type=jnp.float32) + b2_ref[...]  # (bt, E)

    # ---- broadcast leader across words and reduce on the MXU ----------------
    leader_t = jnp.dot(leader, tile_ref[...],
                       preferred_element_type=jnp.float32)        # (bt, W*E)
    prod = x_txt * leader_t
    dot = jnp.dot(prod, gsum_ref[...],
                  preferred_element_type=jnp.float32)             # (bt, W_pad)
    txt_sq = jnp.dot(x_txt * x_txt, gsum_ref[...],
                     preferred_element_type=jnp.float32)          # (bt, W_pad)
    lead_sq = jnp.dot(leader_t * leader_t, gsum_ref[...],
                      preferred_element_type=jnp.float32)         # (bt, W_pad)

    # ---- CosineSimilarity (torch eps = 1e-8), pad lanes -> -inf -------------
    eps = jnp.float32(1e-8)
    logits = dot * jax.lax.rsqrt(jnp.maximum(txt_sq * lead_sq, eps * eps))
    logits = logits + negm_ref[...]                               # mask padding

    # ---- final softmax over words (exact divide for proper normalization) ---
    m = jnp.max(logits, axis=-1, keepdims=True)
    e = jnp.exp(logits - m)                                       # pad -> 0
    s = jnp.sum(e, axis=-1, keepdims=True)
    out_ref[...] = (e[:, :W] / s).astype(out_ref.dtype)


def _pick_batch_tile(B):
    # Multiple of 8; capped at 1024 rows (flattened working set stays a few
    # MiB even double-buffered); capped at ~B/2 so the grid has >=2 steps
    # whenever B >= 16 (keeps both v7x TensorCores busy).
    if B < 16:
        return 8
    bt = min(1024, B // 2)
    return max(8, (bt // 8) * 8)


def imaginarium_forward(x_img, x_txt, y, w1, b1, w2, b2):
    B, C, E = x_img.shape
    W = x_txt.shape[1]
    D = w1.shape[0]
    # The module itself requires len_dense == len_emb on the comb_layer path.
    assert D == E, "comb_layer path requires len_dense == len_emb"

    CE, WE = C * E, W * E
    W_pad = 128 * pl.cdiv(W, 128)

    # ---- lane-dense flattened inputs ----------------------------------------
    x_img_f = jnp.asarray(x_img).reshape(B, CE)
    x_txt_f = jnp.asarray(x_txt).reshape(B, WE)
    y = jnp.asarray(y)

    # ---- host-prepared resident constants -----------------------------------
    w1t = jnp.asarray(w1).T                              # (E, D)
    w1b = jnp.tile(w1t, (C, 1))                          # (C*E, D) fused gather+linear1
    b1r = jnp.asarray(b1).reshape(1, D)
    w2t = jnp.asarray(w2).T                              # (E, D), square since D == E
    b2r = jnp.asarray(b2).reshape(1, D)

    tile_m = jnp.asarray((np.arange(WE)[None, :] % E) ==
                         np.arange(E)[:, None], jnp.float32)        # (E, W*E)
    gsum_m = jnp.asarray((np.arange(WE)[:, None] // E) ==
                         np.arange(W_pad)[None, :], jnp.float32)    # (W*E, W_pad)
    card_id = jnp.asarray(np.arange(CE) // E, jnp.int32).reshape(1, CE)
    neg_mask = jnp.asarray(
        np.where(np.arange(W_pad) < W, 0.0, -1e30), jnp.float32).reshape(1, W_pad)

    # ---- batch tiling (pad irregular B up to a tile multiple) ----------------
    bt = _pick_batch_tile(B)
    B_pad = bt * pl.cdiv(B, bt)
    if B_pad != B:
        pad = B_pad - B
        x_img_f = jnp.pad(x_img_f, ((0, pad), (0, 0)))
        x_txt_f = jnp.pad(x_txt_f, ((0, pad), (0, 0)))
        y = jnp.pad(y, ((0, pad), (0, 0)))
    grid = (B_pad // bt,)

    out = pl.pallas_call(
        imaginarium_kernel,
        out_shape=jax.ShapeDtypeStruct((B_pad, W), jnp.float32),
        grid=grid,
        in_specs=[
            pl.BlockSpec((bt, CE), lambda i: (i, 0)),      # x_img (flattened)
            pl.BlockSpec((bt, WE), lambda i: (i, 0)),      # x_txt (flattened)
            pl.BlockSpec((bt, C), lambda i: (i, 0)),       # y
            pl.BlockSpec(w1b.shape, lambda i: (0, 0)),     # resident weights /
            pl.BlockSpec(b1r.shape, lambda i: (0, 0)),     # constants: constant
            pl.BlockSpec(w2t.shape, lambda i: (0, 0)),     # index_map keeps them
            pl.BlockSpec(b2r.shape, lambda i: (0, 0)),     # in VMEM across steps
            pl.BlockSpec(tile_m.shape, lambda i: (0, 0)),
            pl.BlockSpec(gsum_m.shape, lambda i: (0, 0)),
            pl.BlockSpec(card_id.shape, lambda i: (0, 0)),
            pl.BlockSpec(neg_mask.shape, lambda i: (0, 0)),
        ],
        out_specs=pl.BlockSpec((bt, W), lambda i: (i, 0)),
        compiler_params=pltpu.CompilerParams(
            dimension_semantics=("parallel",)),
    )(x_img_f, x_txt_f, y, w1b, b1r, w2t, b2r, tile_m, gsum_m, card_id, neg_mask)

    return out[:B] if B_pad != B else out


def imaginarium_ref(x_img, x_txt, y, w1, b1, w2, b2):
    """Pure-JAX reference mirroring the PyTorch forward (MLP on all cards,
    then gather) to validate the fused gather/MXU-reduction optimizations."""
    h = jnp.einsum('bce,de->bcd', x_img, w1) + b1
    h = jax.nn.softmax(h, axis=2)
    x_img_d = jnp.einsum('bcd,fd->bcf', h, w2) + b2
    idx = jnp.argmax(y, axis=1)
    leader = jnp.take_along_axis(x_img_d, idx[:, None, None], axis=1)[:, 0, :]
    dot = jnp.sum(x_txt * leader[:, None, :], axis=-1)
    denom = jnp.maximum(jnp.sqrt(jnp.sum(x_txt ** 2, -1)) *
                        jnp.sqrt(jnp.sum(leader ** 2, -1, keepdims=True)), 1e-8)
    logits = dot / denom
    return jax.nn.softmax(logits, axis=1)


if __name__ == "__main__":
    # Small shapes consistent with the module.
    num_cards, num_words = 4, 8
    len_emb = len_dense = 32      # comb_layer path requires len_dense == len_emb

    key = jax.random.PRNGKey(0)
    k = jax.random.split(key, 7)

    # Deterministic synthetic parameters (torch.nn.Linear shapes: (out, in)).
    w1 = 0.1 * jax.random.normal(k[3], (len_dense, len_emb), jnp.float32)
    b1 = 0.1 * jax.random.normal(k[4], (len_dense,), jnp.float32)
    w2 = 0.1 * jax.random.normal(k[5], (len_dense, len_emb), jnp.float32)
    b2 = 0.1 * jax.random.normal(k[6], (len_dense,), jnp.float32)

    ok = True
    # B=2: basic case (single padded tile). B=12: exercises batch padding and
    # a multi-step parallel grid.
    for B in (2, 12):
        x_img = jax.random.normal(k[0], (B, num_cards, len_emb), jnp.float32)
        x_txt = jax.random.normal(k[1], (B, num_words, len_emb), jnp.float32)
        y = jax.random.normal(k[2], (B, num_cards), jnp.float32)

        out = imaginarium_forward(x_img, x_txt, y, w1, b1, w2, b2)
        jax.block_until_ready(out)

        ref = imaginarium_ref(x_img, x_txt, y, w1, b1, w2, b2)
        # Tolerance covers the EUP-approximate reciprocal in the internal
        # feature softmax and lax.rsqrt in the cosine denominator.
        np.testing.assert_allclose(np.asarray(out), np.asarray(ref),
                                   rtol=2e-3, atol=2e-3)
    if ok:
        print("KERNEL_OK")
</pallas_src>

<mosaic_0001>
module attributes {stable_mosaic.version = 11 : i64} {
  func.func @imaginarium_kernel(%arg0: i32, %arg1: memref<8x128xf32, #tpu.memory_space<vmem>>, %arg2: memref<8x256xf32, #tpu.memory_space<vmem>>, %arg3: memref<8x4xf32, #tpu.memory_space<vmem>>, %arg4: memref<128x32xf32, #tpu.memory_space<vmem>>, %arg5: memref<1x32xf32, #tpu.memory_space<vmem>>, %arg6: memref<32x32xf32, #tpu.memory_space<vmem>>, %arg7: memref<1x32xf32, #tpu.memory_space<vmem>>, %arg8: memref<32x256xf32, #tpu.memory_space<vmem>>, %arg9: memref<256x128xf32, #tpu.memory_space<vmem>>, %arg10: memref<1x128xi32, #tpu.memory_space<vmem>>, %arg11: memref<1x128xf32, #tpu.memory_space<vmem>>, %arg12: memref<8x8xf32, #tpu.memory_space<vmem>>) attributes {dimension_semantics = [#tpu.dimension_semantics<parallel>], iteration_bounds = array<i64: 1>, scalar_prefetch = 0 : i64, scratch_operands = 0 : i64, tpu.core_type = #tpu.core_type<tc>, window_params = [{transform_indices = @transform_0, window_bounds = array<i64: 8, 128>}, {transform_indices = @transform_1, window_bounds = array<i64: 8, 256>}, {transform_indices = @transform_2, window_bounds = array<i64: 8, 4>}, {pipeline_mode = #tpu.pipeline_mode<synchronous>, transform_indices = @transform_3, window_bounds = array<i64: 128, 32>}, {pipeline_mode = #tpu.pipeline_mode<synchronous>, transform_indices = @transform_4, window_bounds = array<i64: 1, 32>}, {pipeline_mode = #tpu.pipeline_mode<synchronous>, transform_indices = @transform_5, window_bounds = array<i64: 32, 32>}, {pipeline_mode = #tpu.pipeline_mode<synchronous>, transform_indices = @transform_6, window_bounds = array<i64: 1, 32>}, {pipeline_mode = #tpu.pipeline_mode<synchronous>, transform_indices = @transform_7, window_bounds = array<i64: 32, 256>}, {pipeline_mode = #tpu.pipeline_mode<synchronous>, transform_indices = @transform_8, window_bounds = array<i64: 256, 128>}, {pipeline_mode = #tpu.pipeline_mode<synchronous>, transform_indices = @transform_9, window_bounds = array<i64: 1, 128>}, {pipeline_mode = #tpu.pipeline_mode<synchronous>, transform_indices = @transform_10, window_bounds = array<i64: 1, 128>}, {transform_indices = @transform_11, window_bounds = array<i64: 8, 8>}]} {
    %c0 = arith.constant 0 : index
    %c0_0 = arith.constant 0 : index
    %0 = vector.load %arg1[%c0, %c0_0] : memref<8x128xf32, #tpu.memory_space<vmem>>, vector<8x128xf32>
    %c0_1 = arith.constant 0 : index
    %c0_2 = arith.constant 0 : index
    %1 = vector.load %arg2[%c0_1, %c0_2] : memref<8x256xf32, #tpu.memory_space<vmem>>, vector<8x256xf32>
    %c0_3 = arith.constant 0 : index
    %c0_4 = arith.constant 0 : index
    %2 = vector.load %arg3[%c0_3, %c0_4] : memref<8x4xf32, #tpu.memory_space<vmem>>, vector<8x4xf32>
    %3 = tpu.iota {dimensions = array<i32: 1>} : vector<8x4xi32>
    %cst = arith.constant dense<0xFF800000> : vector<8xf32>
    %4 = vector.multi_reduction <maximumf>, %2, %cst [1] : vector<8x4xf32> to vector<8xf32>
    %5 = vector.shape_cast %4 : vector<8xf32> to vector<8x1xf32>
    %6 = vector.broadcast %5 : vector<8x1xf32> to vector<8x4xf32>
    %7 = arith.cmpf oeq, %2, %6 : vector<8x4xf32>
    %c4_i32 = arith.constant 4 : i32
    %8 = vector.broadcast %c4_i32 : i32 to vector<8x4xi32>
    %9 = arith.select %7, %3, %8 : vector<8x4xi1>, vector<8x4xi32>
    %cst_5 = arith.constant dense<2147483647> : vector<8xi32>
    %10 = vector.multi_reduction <minsi>, %9, %cst_5 [1] : vector<8x4xi32> to vector<8xi32>
    %11 = vector.shape_cast %10 : vector<8xi32> to vector<8x1xi32>
    %c0_6 = arith.constant 0 : index
    %c0_7 = arith.constant 0 : index
    %12 = vector.load %arg10[%c0_6, %c0_7] : memref<1x128xi32, #tpu.memory_space<vmem>>, vector<1x128xi32>
    %13 = vector.broadcast %12 : vector<1x128xi32> to vector<8x128xi32>
    %14 = vector.broadcast %11 : vector<8x1xi32> to vector<8x128xi32>
    %15 = arith.cmpi eq, %13, %14 : vector<8x128xi32>
    %16 = arith.extui %15 : vector<8x128xi1> to vector<8x128xi32>
    %17 = arith.sitofp %16 : vector<8x128xi32> to vector<8x128xf32>
    %18 = arith.mulf %0, %17 : vector<8x128xf32>
    %c0_8 = arith.constant 0 : index
    %c0_9 = arith.constant 0 : index
    %19 = vector.load %arg4[%c0_8, %c0_9] : memref<128x32xf32, #tpu.memory_space<vmem>>, vector<128x32xf32>
    %cst_10 = arith.constant dense<0.000000e+00> : vector<8x32xf32>
    %20 = tpu.matmul %18, %19, %cst_10 {dimension_numbers = #tpu.dot_dimension_numbers<[1], [0], [0], [1], [0, 0, 1, 1], [], []>} : vector<8x128xf32>, vector<128x32xf32>, vector<8x32xf32> -> vector<8x32xf32>
    %c0_11 = arith.constant 0 : index
    %c0_12 = arith.constant 0 : index
    %21 = vector.load %arg5[%c0_11, %c0_12] : memref<1x32xf32, #tpu.memory_space<vmem>>, vector<1x32xf32>
    %22 = vector.broadcast %21 : vector<1x32xf32> to vector<8x32xf32>
    %23 = arith.addf %20, %22 : vector<8x32xf32>
    %cst_13 = arith.constant dense<0xFF800000> : vector<8xf32>
    %24 = vector.multi_reduction <maximumf>, %23, %cst_13 [1] : vector<8x32xf32> to vector<8xf32>
    %25 = vector.shape_cast %24 : vector<8xf32> to vector<8x1xf32>
    %26 = vector.broadcast %25 : vector<8x1xf32> to vector<8x32xf32>
    %27 = arith.subf %23, %26 : vector<8x32xf32>
    %28 = math.exp %27 : vector<8x32xf32>
    %cst_14 = arith.constant dense<0.000000e+00> : vector<8xf32>
    %29 = vector.multi_reduction <add>, %28, %cst_14 [1] : vector<8x32xf32> to vector<8xf32>
    %30 = vector.shape_cast %29 : vector<8xf32> to vector<8x1xf32>
    %31 = tpu.reciprocal %30 {approx = true} : vector<8x1xf32> -> vector<8x1xf32>
    %32 = vector.broadcast %31 : vector<8x1xf32> to vector<8x32xf32>
    %33 = arith.mulf %28, %32 : vector<8x32xf32>
    %c0_15 = arith.constant 0 : index
    %c0_16 = arith.constant 0 : index
    %34 = vector.load %arg6[%c0_15, %c0_16] : memref<32x32xf32, #tpu.memory_space<vmem>>, vector<32x32xf32>
    %cst_17 = arith.constant dense<0.000000e+00> : vector<8x32xf32>
    %35 = tpu.matmul %33, %34, %cst_17 {dimension_numbers = #tpu.dot_dimension_numbers<[1], [0], [0], [1], [0, 0, 1, 1], [], []>} : vector<8x32xf32>, vector<32x32xf32>, vector<8x32xf32> -> vector<8x32xf32>
    %c0_18 = arith.constant 0 : index
    %c0_19 = arith.constant 0 : index
    %36 = vector.load %arg7[%c0_18, %c0_19] : memref<1x32xf32, #tpu.memory_space<vmem>>, vector<1x32xf32>
    %37 = vector.broadcast %36 : vector<1x32xf32> to vector<8x32xf32>
    %38 = arith.addf %35, %37 : vector<8x32xf32>
    %c0_20 = arith.constant 0 : index
    %c0_21 = arith.constant 0 : index
    %39 = vector.load %arg8[%c0_20, %c0_21] : memref<32x256xf32, #tpu.memory_space<vmem>>, vector<32x256xf32>
    %cst_22 = arith.constant dense<0.000000e+00> : vector<8x256xf32>
    %40 = tpu.matmul %38, %39, %cst_22 {dimension_numbers = #tpu.dot_dimension_numbers<[1], [0], [0], [1], [0, 0, 1, 1], [], []>} : vector<8x32xf32>, vector<32x256xf32>, vector<8x256xf32> -> vector<8x256xf32>
    %41 = arith.mulf %1, %40 : vector<8x256xf32>
    %c0_23 = arith.constant 0 : index
    %c0_24 = arith.constant 0 : index
    %42 = vector.load %arg9[%c0_23, %c0_24] : memref<256x128xf32, #tpu.memory_space<vmem>>, vector<256x128xf32>
    %cst_25 = arith.constant dense<0.000000e+00> : vector<8x128xf32>
    %43 = tpu.matmul %41, %42, %cst_25 {dimension_numbers = #tpu.dot_dimension_numbers<[1], [0], [0], [1], [0, 0, 1, 1], [], []>} : vector<8x256xf32>, vector<256x128xf32>, vector<8x128xf32> -> vector<8x128xf32>
    %44 = arith.mulf %1, %1 : vector<8x256xf32>
    %c0_26 = arith.constant 0 : index
    %c0_27 = arith.constant 0 : index
    %45 = vector.load %arg9[%c0_26, %c0_27] : memref<256x128xf32, #tpu.memory_space<vmem>>, vector<256x128xf32>
    %cst_28 = arith.constant dense<0.000000e+00> : vector<8x128xf32>
    %46 = tpu.matmul %44, %45, %cst_28 {dimension_numbers = #tpu.dot_dimension_numbers<[1], [0], [0], [1], [0, 0, 1, 1], [], []>} : vector<8x256xf32>, vector<256x128xf32>, vector<8x128xf32> -> vector<8x128xf32>
    %47 = arith.mulf %40, %40 : vector<8x256xf32>
    %c0_29 = arith.constant 0 : index
    %c0_30 = arith.constant 0 : index
    %48 = vector.load %arg9[%c0_29, %c0_30] : memref<256x128xf32, #tpu.memory_space<vmem>>, vector<256x128xf32>
    %cst_31 = arith.constant dense<0.000000e+00> : vector<8x128xf32>
    %49 = tpu.matmul %47, %48, %cst_31 {dimension_numbers = #tpu.dot_dimension_numbers<[1], [0], [0], [1], [0, 0, 1, 1], [], []>} : vector<8x256xf32>, vector<256x128xf32>, vector<8x128xf32> -> vector<8x128xf32>
    %50 = arith.mulf %46, %49 : vector<8x128xf32>
    %cst_32 = arith.constant 9.99999993E-9 : f32
    %cst_33 = arith.constant 9.99999993E-9 : f32
    %51 = arith.mulf %cst_32, %cst_33 : f32
    %52 = vector.broadcast %51 : f32 to vector<8x128xf32>
    %53 = arith.maximumf %50, %52 : vector<8x128xf32>
    %54 = math.rsqrt %53 : vector<8x128xf32>
    %55 = arith.mulf %43, %54 : vector<8x128xf32>
    %c0_34 = arith.constant 0 : index
    %c0_35 = arith.constant 0 : index
    %56 = vector.load %arg11[%c0_34, %c0_35] : memref<1x128xf32, #tpu.memory_space<vmem>>, vector<1x128xf32>
    %57 = vector.broadcast %56 : vector<1x128xf32> to vector<8x128xf32>
    %58 = arith.addf %55, %57 : vector<8x128xf32>
    %cst_36 = arith.constant dense<0xFF800000> : vector<8xf32>
    %59 = vector.multi_reduction <maximumf>, %58, %cst_36 [1] : vector<8x128xf32> to vector<8xf32>
    %60 = vector.shape_cast %59 : vector<8xf32> to vector<8x1xf32>
    %61 = vector.broadcast %60 : vector<8x1xf32> to vector<8x128xf32>
    %62 = arith.subf %58, %61 : vector<8x128xf32>
    %63 = math.exp %62 : vector<8x128xf32>
    %cst_37 = arith.constant dense<0.000000e+00> : vector<8xf32>
    %64 = vector.multi_reduction <add>, %63, %cst_37 [1] : vector<8x128xf32> to vector<8xf32>
    %65 = vector.shape_cast %64 : vector<8xf32> to vector<8x1xf32>
    %66 = vector.extract_strided_slice %63 {offsets = [0, 0], sizes = [8, 8], strides = [1, 1]} : vector<8x128xf32> to vector<8x8xf32>
    %67 = vector.broadcast %65 : vector<8x1xf32> to vector<8x8xf32>
    %68 = arith.divf %66, %67 : vector<8x8xf32>
    %c0_38 = arith.constant 0 : index
    %c0_39 = arith.constant 0 : index
    %69 = vector.load %arg12[%c0_38, %c0_39] : memref<8x8xf32, #tpu.memory_space<vmem>>, vector<8x8xf32>
    tpu.vector_store %arg12[%c0_38, %c0_39], %68 {strides = array<i32>} : memref<8x8xf32, #tpu.memory_space<vmem>>, vector<8x8xf32>,
    return
  }
  func.func @transform_0(%arg0: i32) -> (i32, i32) {
    %c0_i32 = arith.constant 0 : i32
    %c0_i32_0 = arith.constant 0 : i32
    return %arg0, %c0_i32 : i32, i32
  }
  func.func @transform_1(%arg0: i32) -> (i32, i32) {
    %c0_i32 = arith.constant 0 : i32
    %c0_i32_0 = arith.constant 0 : i32
    return %arg0, %c0_i32 : i32, i32
  }
  func.func @transform_2(%arg0: i32) -> (i32, i32) {
    %c0_i32 = arith.constant 0 : i32
    %c0_i32_0 = arith.constant 0 : i32
    return %arg0, %c0_i32 : i32, i32
  }
  func.func @transform_3(%arg0: i32) -> (i32, i32) {
    %c0_i32 = arith.constant 0 : i32
    %c0_i32_0 = arith.constant 0 : i32
    %c0_i32_1 = arith.constant 0 : i32
    return %c0_i32, %c0_i32_0 : i32, i32
  }
  func.func @transform_4(%arg0: i32) -> (i32, i32) {
    %c0_i32 = arith.constant 0 : i32
    %c0_i32_0 = arith.constant 0 : i32
    %c0_i32_1 = arith.constant 0 : i32
    return %c0_i32, %c0_i32_0 : i32, i32
  }
  func.func @transform_5(%arg0: i32) -> (i32, i32) {
    %c0_i32 = arith.constant 0 : i32
    %c0_i32_0 = arith.constant 0 : i32
    %c0_i32_1 = arith.constant 0 : i32
    return %c0_i32, %c0_i32_0 : i32, i32
  }
  func.func @transform_6(%arg0: i32) -> (i32, i32) {
    %c0_i32 = arith.constant 0 : i32
    %c0_i32_0 = arith.constant 0 : i32
    %c0_i32_1 = arith.constant 0 : i32
    return %c0_i32, %c0_i32_0 : i32, i32
  }
  func.func @transform_7(%arg0: i32) -> (i32, i32) {
    %c0_i32 = arith.constant 0 : i32
    %c0_i32_0 = arith.constant 0 : i32
    %c0_i32_1 = arith.constant 0 : i32
    return %c0_i32, %c0_i32_0 : i32, i32
  }
  func.func @transform_8(%arg0: i32) -> (i32, i32) {
    %c0_i32 = arith.constant 0 : i32
    %c0_i32_0 = arith.constant 0 : i32
    %c0_i32_1 = arith.constant 0 : i32
    return %c0_i32, %c0_i32_0 : i32, i32
  }
  func.func @transform_9(%arg0: i32) -> (i32, i32) {
    %c0_i32 = arith.constant 0 : i32
    %c0_i32_0 = arith.constant 0 : i32
    %c0_i32_1 = arith.constant 0 : i32
    return %c0_i32, %c0_i32_0 : i32, i32
  }
  func.func @transform_10(%arg0: i32) -> (i32, i32) {
    %c0_i32 = arith.constant 0 : i32
    %c0_i32_0 = arith.constant 0 : i32
    %c0_i32_1 = arith.constant 0 : i32
    return %c0_i32, %c0_i32_0 : i32, i32
  }
  func.func @transform_11(%arg0: i32) -> (i32, i32) {
    %c0_i32 = arith.constant 0 : i32
    %c0_i32_0 = arith.constant 0 : i32
    return %arg0, %c0_i32 : i32, i32
  }
}

</mosaic_0001>

<llo_original>
// kernel: tpu_custom_call.1
$region0: #{tpu_custom_call.1}
  #allocation0 [shape = 'u32[]', space=smem, size = 0x4, offset = 0x4, fixed_abs, tag = 'smem constant byte address 0x4 - core index']
  #allocation1 [shape = 'u32[144,128]{1,0:T(1,128)}', space=vmem, size = 0x12000, scoped, tag = 'internal scratch']
  %s0 = inlined_call_operand.vmem [shape: f32[8,128], index: 0, kind: input, shape index: {}]
  %s1 = inlined_call_operand.vmem [shape: f32[8,256], index: 1, kind: input, shape index: {}]
  %s2 = inlined_call_operand.vmem [shape: f32[8,4], index: 2, kind: input, shape index: {}]
  %s3 = inlined_call_operand.vmem [shape: f32[128,32], index: 3, kind: input, shape index: {}]
  %s4 = inlined_call_operand.vmem [shape: f32[1,32], index: 4, kind: input, shape index: {}]
  %s5 = inlined_call_operand.vmem [shape: f32[32,32], index: 5, kind: input, shape index: {}]
  %s6 = inlined_call_operand.vmem [shape: f32[1,32], index: 6, kind: input, shape index: {}]
  %s7 = inlined_call_operand.vmem [shape: f32[32,256], index: 7, kind: input, shape index: {}]
  %s8 = inlined_call_operand.hbm [shape: f32[256,128], index: 8, kind: input, shape index: {}]
  %s9 = inlined_call_operand.vmem [shape: s32[1,128], index: 9, kind: input, shape index: {}]
  %s10 = inlined_call_operand.vmem [shape: f32[1,128], index: 10, kind: input, shape index: {}]
  %s11 = inlined_call_operand.hbm [shape: f32[8,8], index: 11, kind: output, shape index: {}]
  %s12 = sld [smem:[#allocation0]]
  $region58: #{tpu_custom_call.1} parent=0
    _
  %s14 = ssub.s32 1, %s12
  %s15 = scalar_select 0, %s14, %s12
  $region1: #{tpu_custom_call.1} parent=0
    #allocation2 [shape = 'u8[131072]{0}', space=vmem, size = 0x20000, scoped, tag = 'input window, operand 8, single buffered']
    #allocation3 [shape = 's32[1]{0}', space=sflag, size = 0x4, scoped, tag = 'scoped memory for tpu_custom_call.1']
    #allocation4 [shape = 's32[1]{0}', space=sflag, size = 0x4, scoped, tag = 'scoped memory for tpu_custom_call.1']
    #allocation5 [shape = 'u8[4096]{0}', space=vmem, size = 0x1000, scoped, tag = 'output window, operand 0, single buffered']
    %16 = vsyncpa [#allocation3], 0
    %17 = vsyncpa [#allocation4], 0
    // Predicated region
    $region2: #{tpu_custom_call.1} parent=1 // pred_check
      _
    $region3: #{tpu_custom_call.1} parent=1 // pred_check_branch
      %19 = sbr.rel (0) target = $region5
    $region4: #{tpu_custom_call.1} parent=1 // pred_region
      _
    $region5: #{tpu_custom_call.1} parent=1 // pred_fallthru
      _
    // Predicated region
    $region6: #{tpu_custom_call.1} parent=1 // pred_check
      _
    $region7: #{tpu_custom_call.1} parent=1 // pred_check_branch
      %21 = sbr.rel (0) target = $region9
    $region8: #{tpu_custom_call.1} parent=1 // pred_region
      _
    $region9: #{tpu_custom_call.1} parent=1 // pred_fallthru
      _
    // Predicated region
    $region10: #{tpu_custom_call.1} parent=1 // pred_check
      _
    $region11: #{tpu_custom_call.1} parent=1 // pred_check_branch
      %23 = sbr.rel (0) target = $region13
    $region12: #{tpu_custom_call.1} parent=1 // pred_region
      _
    $region13: #{tpu_custom_call.1} parent=1 // pred_fallthru
      _
    // Predicated region
    $region14: #{tpu_custom_call.1} parent=1 // pred_check
      _
    $region15: #{tpu_custom_call.1} parent=1 // pred_check_branch
      %25 = sbr.rel (0) target = $region17
    $region16: #{tpu_custom_call.1} parent=1 // pred_region
      _
    $region17: #{tpu_custom_call.1} parent=1 // pred_fallthru
      _
    // Predicated region
    $region18: #{tpu_custom_call.1} parent=1 // pred_check
      _
    $region19: #{tpu_custom_call.1} parent=1 // pred_check_branch
      %27 = sbr.rel (0) target = $region21
    $region20: #{tpu_custom_call.1} parent=1 // pred_region
      _
    $region21: #{tpu_custom_call.1} parent=1 // pred_fallthru
      _
    // Predicated region
    $region22: #{tpu_custom_call.1} parent=1 // pred_check
      _
    $region23: #{tpu_custom_call.1} parent=1 // pred_check_branch
      %29 = sbr.rel (0) target = $region25
    $region24: #{tpu_custom_call.1} parent=1 // pred_region
      _
    $region25: #{tpu_custom_call.1} parent=1 // pred_fallthru
      _
    // Predicated region
    $region26: #{tpu_custom_call.1} parent=1 // pred_check
      _
    $region27: #{tpu_custom_call.1} parent=1 // pred_check_branch
      %31 = sbr.rel (0) target = $region29
    $region28: #{tpu_custom_call.1} parent=1 // pred_region
      _
    $region29: #{tpu_custom_call.1} parent=1 // pred_fallthru
      _
    // Predicated region
    $region30: #{tpu_custom_call.1} parent=1 // pred_check
      _
    $region31: #{tpu_custom_call.1} parent=1 // pred_check_branch
      %33 = sbr.rel (0) target = $region33
    $region32: #{tpu_custom_call.1} parent=1 // pred_region
      _
    $region33: #{tpu_custom_call.1} parent=1 // pred_fallthru
      _
    // Predicated region
    $region34: #{tpu_custom_call.1} parent=1 // pred_check
      _
    $region35: #{tpu_custom_call.1} parent=1 // pred_check_branch
      %35 = sbr.rel (0) target = $region37
    $region36: #{tpu_custom_call.1} parent=1 // pred_region
      %s37 = ssub.s32 4096, 4096
      %38 = vsyncadd [#allocation3], %s37
      %s39 = sshll.u32 [#allocation2], 4
      %s40 = int_to_ptr.vmem [resolvable:$true] %s39
      %45 = dma.hbm_to_vmem [thread:$0]  %s8, 4096, %s40, [#allocation3], 128, 128, 8
    $region37: #{tpu_custom_call.1} parent=1 // pred_fallthru
      _
    // Predicated region
    $region38: #{tpu_custom_call.1} parent=1 // pred_check
      _
    $region39: #{tpu_custom_call.1} parent=1 // pred_check_branch
      %47 = sbr.rel (0) target = $region41
    $region40: #{tpu_custom_call.1} parent=1 // pred_region
      _
    $region41: #{tpu_custom_call.1} parent=1 // pred_fallthru
      _
    // Predicated region
    $region42: #{tpu_custom_call.1} parent=1 // pred_check
      _
    $region43: #{tpu_custom_call.1} parent=1 // pred_check_branch
      %49 = sbr.rel (0) target = $region45
    $region44: #{tpu_custom_call.1} parent=1 // pred_region
      _
    $region45: #{tpu_custom_call.1} parent=1 // pred_fallthru
      _
    // Predicated region
    $region46: #{tpu_custom_call.1} parent=1 // pred_check
      _
    $region47: #{tpu_custom_call.1} parent=1 // pred_check_branch
      %51 = sbr.rel (0) target = $region49
    $region48: #{tpu_custom_call.1} parent=1 // pred_region
      %52 = dma.done [#allocation3], 4096
    $region49: #{tpu_custom_call.1} parent=1 // pred_fallthru
      _
    %v53 = vld [vmem:[%s0] sm:$0xff]
    %v54 = vld [vmem:[%s1] sm:$0xff]
    %v55 = vld [vmem:[%s1 + $0x8] sm:$0xff]
    %v56 = vld [vmem:[%s2] sm:$0xff]
    %v57 = vlaneseq
    %v58 = vand.u32 %v57, 127
    %vm59 = vcmask 31744
    %v60 = vsel %vm59, %v56, -inf
    %61 = vmax.xlane.f32.xlu0 %v60
    %v62 = vpop.xlane.xlu0 %61
    %vm63 = vcmp.eq.f32.partialorder %v56, %v62
    %v64 = vsel %vm63, %v58, 4
    %v65 = vsel %vm59, %v64, 2147483647
    %v66 = vand.u32 %v65, 65535
    %v67 = vshra.s32 %v65, 16
    %v68 = vcvt.s32.f32 %v66
    %v69 = vcvt.s32.f32 %v67
    %70 = vmin.xlane.f32.xlu0 %v69
    %v71 = vpop.xlane.xlu0 %70
    %vm72 = vcmp.eq.f32.partialorder %v69, %v71
    %v73 = vsel %vm72, %v68, inf
    %74 = vmin.xlane.f32.xlu0 %v73
    %v75 = vpop.xlane.xlu0 %74
    %v76 = vcvt.f32.s32 %v75
    %v77 = vcvt.f32.s32 %v71
    %v78 = vshll.u32 %v77, 16
    %v79 = vadd.s32 %v78, %v76
    %v80 = vld [vmem:[%s9] sm:$0x1]
    %v81 = vlaneseq
    %v82 = vshrl.u32 %v81, 7
    %v83 = vsub.s32 0, %v82
    %v84 = vrot.slane %v80, %v83
    %vm85 = vcmp.eq.s32.totalorder %v84, %v79
    %v86 = vsel %vm85, 1, 0
    %v87 = vcvt.s32.f32 %v86
    %v88 = vmul.f32 %v53, %v87
    %v89 = vld [vmem:[%s3] sm:$0xff]
    %v90 = vld [vmem:[%s3 + $0x8] sm:$0xff]
    %v91 = vld [vmem:[%s3 + $0x10] sm:$0xff]
    %v92 = vld [vmem:[%s3 + $0x18] sm:$0xff]
    %v93 = vld [vmem:[%s3 + $0x20] sm:$0xff]
    %v94 = vld [vmem:[%s3 + $0x28] sm:$0xff]
    %v95 = vld [vmem:[%s3 + $0x30] sm:$0xff]
    %v96 = vld [vmem:[%s3 + $0x38] sm:$0xff]
    %v97 = vld [vmem:[%s3 + $0x40] sm:$0xff]
    %v98 = vld [vmem:[%s3 + $0x48] sm:$0xff]
    %v99 = vld [vmem:[%s3 + $0x50] sm:$0xff]
    %v100 = vld [vmem:[%s3 + $0x58] sm:$0xff]
    %v101 = vld [vmem:[%s3 + $0x60] sm:$0xff]
    %v102 = vld [vmem:[%s3 + $0x68] sm:$0xff]
    %v103 = vld [vmem:[%s3 + $0x70] sm:$0xff]
    %v104 = vld [vmem:[%s3 + $0x78] sm:$0xff]
    %v105 = vld [vmem:[%s4] sm:$0x1]
    %v107 = vlaneseq
    %v108 = vshrl.u32 %v107, 7
    %v109 = vsub.s32 0, %v108
    %v110 = vrot.slane %v105, %v109
    %112 = vmatprep.subr.mxu0 0.0
    %113 = vmatpush1.msra.mxu0 %v104
    %114 = vmatprep.subr.mxu0 0.0
    %115 = vmatpush1.msra.mxu0 %v103
    %116 = vmatprep.subr.mxu0 0.0
    %117 = vmatpush1.msra.mxu0 %v102
    %118 = vmatprep.subr.mxu0 0.0
    %119 = vmatpush1.msra.mxu0 %v101
    %120 = vmatprep.subr.mxu0 0.0
    %121 = vmatpush1.msra.mxu0 %v100
    %122 = vmatprep.subr.mxu0 0.0
    %123 = vmatpush1.msra.mxu0 %v99
    %124 = vmatprep.subr.mxu0 0.0
    %125 = vmatpush1.msra.mxu0 %v98
    %126 = vmatprep.subr.mxu0 0.0
    %127 = vmatpush1.msra.mxu0 %v97
    %128 = vmatprep.subr.mxu0 0.0
    %129 = vmatpush1.msra.mxu0 %v96
    %130 = vmatprep.subr.mxu0 0.0
    %131 = vmatpush1.msra.mxu0 %v95
    %132 = vmatprep.subr.mxu0 0.0
    %133 = vmatpush1.msra.mxu0 %v94
    %134 = vmatprep.subr.mxu0 0.0
    %135 = vmatpush1.msra.mxu0 %v93
    %136 = vmatprep.subr.mxu0 0.0
    %137 = vmatpush1.msra.mxu0 %v92
    %138 = vmatprep.subr.mxu0 0.0
    %139 = vmatpush1.msra.mxu0 %v91
    %140 = vmatprep.subr.mxu0 0.0
    %141 = vmatpush1.msra.mxu0 %v90
    %142 = vmatprep.subr.mxu0 0.0
    %143 = vmatpush1.msra.mxu0 %v89
    %144 = vmatprep.subr.mxu0 0.0
    %145 = vmatpush2.msra.mxu0 0.0
    %146 = vmatprep.subr.mxu0 0.0
    %147 = vmatpush2.msra.mxu0 0.0
    %148 = vmatprep.subr.mxu0 0.0
    %149 = vmatpush2.msra.mxu0 0.0
    %150 = vmatprep.subr.mxu0 0.0
    %151 = vmatpush2.msra.mxu0 0.0
    %152 = vmatprep.subr.mxu0 0.0
    %153 = vmatpush2.msra.mxu0 0.0
    %154 = vmatprep.subr.mxu0 0.0
    %155 = vmatpush2.msra.mxu0 0.0
    %156 = vmatprep.subr.mxu0 0.0
    %157 = vmatpush2.msra.mxu0 0.0
    %158 = vmatprep.subr.mxu0 0.0
    %159 = vmatpush2.msra.mxu0 0.0
    %160 = vmatprep.subr.mxu0 0.0
    %161 = vmatpush2.msra.mxu0 0.0
    %162 = vmatprep.subr.mxu0 0.0
    %163 = vmatpush2.msra.mxu0 0.0
    %164 = vmatprep.subr.mxu0 0.0
    %165 = vmatpush2.msra.mxu0 0.0
    %166 = vmatprep.subr.mxu0 0.0
    %167 = vmatpush2.msra.mxu0 0.0
    %168 = vmatprep.subr.mxu0 0.0
    %169 = vmatpush2.msra.mxu0 0.0
    %170 = vmatprep.subr.mxu0 0.0
    %171 = vmatpush2.msra.mxu0 0.0
    %172 = vmatprep.subr.mxu0 0.0
    %173 = vmatpush2.msra.mxu0 0.0
    %174 = vmatprep.subr.mxu0 0.0
    %175 = vmatpush2.msra.mxu0 0.0
    %176 = vmatprep.mubr.f32.mxu0 0.0
    %177 = vmatmul.mubr.f32.gmra.mxu0 %v88
    %v178 = vpop.f32.mrf.mxu0
    %v179 = vadd.f32 %v110, %v178
    %v180 = vpop.f32.mrf.mxu0
    %181 = vdwg.mxu0
    %vm182 = vcmask 261120
    %v183 = vsel %vm182, %v179, -inf
    %184 = vmax.xlane.f32.xlu0 %v183
    %v185 = vpop.xlane.xlu0 %184
    %v186 = vsub.f32 %v179, %v185
    %v187 = vmul.f32 %v186, 1.442695
    %v188 = vpow.pop %v187
    %v189 = vsel %vm182, %v188, 0.0
    %190 = vadd.xlane.f32.xlu0 %v189
    %v191 = vpop.xlane.xlu0 %190
    %v192 = vrcp.pop %v191
    %v193 = vmul.f32 %v188, %v192
    %v194 = vld [vmem:[%s5] sm:$0xff]
    %v195 = vld [vmem:[%s5 + $0x8] sm:$0xff]
    %v196 = vld [vmem:[%s5 + $0x10] sm:$0xff]
    %v197 = vld [vmem:[%s5 + $0x18] sm:$0xff]
    %v198 = vld [vmem:[%s6] sm:$0x1]
    %v200 = vlaneseq
    %v201 = vshrl.u32 %v200, 7
    %v202 = vsub.s32 0, %v201
    %v203 = vrot.slane %v198, %v202
    %v206 = vsel %vm182, %v193, 0
    %208 = vmatprep.subr.mxu0 0.0
    %209 = vmatpush1.msra.mxu0 0.0
    %210 = vmatprep.subr.mxu0 0.0
    %211 = vmatpush1.msra.mxu0 0.0
    %212 = vmatprep.subr.mxu0 0.0
    %213 = vmatpush1.msra.mxu0 0.0
    %214 = vmatprep.subr.mxu0 0.0
    %215 = vmatpush1.msra.mxu0 0.0
    %216 = vmatprep.subr.mxu0 0.0
    %217 = vmatpush1.msra.mxu0 0.0
    %218 = vmatprep.subr.mxu0 0.0
    %219 = vmatpush1.msra.mxu0 0.0
    %220 = vmatprep.subr.mxu0 0.0
    %221 = vmatpush1.msra.mxu0 0.0
    %222 = vmatprep.subr.mxu0 0.0
    %223 = vmatpush1.msra.mxu0 0.0
    %224 = vmatprep.subr.mxu0 0.0
    %225 = vmatpush1.msra.mxu0 0.0
    %226 = vmatprep.subr.mxu0 0.0
    %227 = vmatpush1.msra.mxu0 0.0
    %228 = vmatprep.subr.mxu0 0.0
    %229 = vmatpush1.msra.mxu0 0.0
    %230 = vmatprep.subr.mxu0 0.0
    %231 = vmatpush1.msra.mxu0 0.0
    %232 = vmatprep.subr.mxu0 0.0
    %233 = vmatpush1.msra.mxu0 %v197
    %234 = vmatprep.subr.mxu0 0.0
    %235 = vmatpush1.msra.mxu0 %v196
    %236 = vmatprep.subr.mxu0 0.0
    %237 = vmatpush1.msra.mxu0 %v195
    %238 = vmatprep.subr.mxu0 0.0
    %239 = vmatpush1.msra.mxu0 %v194
    %240 = vmatprep.subr.mxu0 0.0
    %241 = vmatpush2.msra.mxu0 0.0
    %242 = vmatprep.subr.mxu0 0.0
    %243 = vmatpush2.msra.mxu0 0.0
    %244 = vmatprep.subr.mxu0 0.0
    %245 = vmatpush2.msra.mxu0 0.0
    %246 = vmatprep.subr.mxu0 0.0
    %247 = vmatpush2.msra.mxu0 0.0
    %248 = vmatprep.subr.mxu0 0.0
    %249 = vmatpush2.msra.mxu0 0.0
    %250 = vmatprep.subr.mxu0 0.0
    %251 = vmatpush2.msra.mxu0 0.0
    %252 = vmatprep.subr.mxu0 0.0
    %253 = vmatpush2.msra.mxu0 0.0
    %254 = vmatprep.subr.mxu0 0.0
    %255 = vmatpush2.msra.mxu0 0.0
    %256 = vmatprep.subr.mxu0 0.0
    %257 = vmatpush2.msra.mxu0 0.0
    %258 = vmatprep.subr.mxu0 0.0
    %259 = vmatpush2.msra.mxu0 0.0
    %260 = vmatprep.subr.mxu0 0.0
    %261 = vmatpush2.msra.mxu0 0.0
    %262 = vmatprep.subr.mxu0 0.0
    %263 = vmatpush2.msra.mxu0 0.0
    %264 = vmatprep.subr.mxu0 0.0
    %265 = vmatpush2.msra.mxu0 0.0
    %266 = vmatprep.subr.mxu0 0.0
    %267 = vmatpush2.msra.mxu0 0.0
    %268 = vmatprep.subr.mxu0 0.0
    %269 = vmatpush2.msra.mxu0 0.0
    %270 = vmatprep.subr.mxu0 0.0
    %271 = vmatpush2.msra.mxu0 0.0
    %272 = vmatprep.mubr.f32.mxu0 0.0
    %273 = vmatmul.mubr.f32.gmra.mxu0 %v206
    %v274 = vpop.f32.mrf.mxu0
    %v275 = vadd.f32 %v203, %v274
    %v276 = vpop.f32.mrf.mxu0
    %277 = vdwg.mxu0
    %v278 = vld [vmem:[%s7] sm:$0xff]
    %v279 = vld [vmem:[%s7 + $0x8] sm:$0xff]
    %v280 = vld [vmem:[%s7 + $0x10] sm:$0xff]
    %v281 = vld [vmem:[%s7 + $0x18] sm:$0xff]
    %v282 = vld [vmem:[%s7 + $0x20] sm:$0xff]
    %v283 = vld [vmem:[%s7 + $0x28] sm:$0xff]
    %v284 = vld [vmem:[%s7 + $0x30] sm:$0xff]
    %v285 = vld [vmem:[%s7 + $0x38] sm:$0xff]
    %v287 = vsel %vm182, %v275, 0
    %289 = vmatprep.subr.mxu0 0.0
    %290 = vmatpush1.msra.mxu0 0.0
    %291 = vmatprep.subr.mxu0 0.0
    %292 = vmatpush1.msra.mxu0 0.0
    %293 = vmatprep.subr.mxu0 0.0
    %294 = vmatpush1.msra.mxu0 0.0
    %295 = vmatprep.subr.mxu0 0.0
    %296 = vmatpush1.msra.mxu0 0.0
    %297 = vmatprep.subr.mxu0 0.0
    %298 = vmatpush1.msra.mxu0 0.0
    %299 = vmatprep.subr.mxu0 0.0
    %300 = vmatpush1.msra.mxu0 0.0
    %301 = vmatprep.subr.mxu0 0.0
    %302 = vmatpush1.msra.mxu0 0.0
    %303 = vmatprep.subr.mxu0 0.0
    %304 = vmatpush1.msra.mxu0 0.0
    %305 = vmatprep.subr.mxu0 0.0
    %306 = vmatpush1.msra.mxu0 0.0
    %307 = vmatprep.subr.mxu0 0.0
    %308 = vmatpush1.msra.mxu0 0.0
    %309 = vmatprep.subr.mxu0 0.0
    %310 = vmatpush1.msra.mxu0 0.0
    %311 = vmatprep.subr.mxu0 0.0
    %312 = vmatpush1.msra.mxu0 0.0
    %313 = vmatprep.subr.mxu0 %v285
    %314 = vmatpush1.msra.mxu0 %v284
    %315 = vmatprep.subr.mxu0 %v283
    %316 = vmatpush1.msra.mxu0 %v282
    %317 = vmatprep.subr.mxu0 %v281
    %318 = vmatpush1.msra.mxu0 %v280
    %319 = vmatprep.subr.mxu0 %v279
    %320 = vmatpush1.msra.mxu0 %v278
    %321 = vmatprep.subr.mxu0 0.0
    %322 = vmatpush2.msra.mxu0 0.0
    %323 = vmatprep.subr.mxu0 0.0
    %324 = vmatpush2.msra.mxu0 0.0
    %325 = vmatprep.subr.mxu0 0.0
    %326 = vmatpush2.msra.mxu0 0.0
    %327 = vmatprep.subr.mxu0 0.0
    %328 = vmatpush2.msra.mxu0 0.0
    %329 = vmatprep.subr.mxu0 0.0
    %330 = vmatpush2.msra.mxu0 0.0
    %331 = vmatprep.subr.mxu0 0.0
    %332 = vmatpush2.msra.mxu0 0.0
    %333 = vmatprep.subr.mxu0 0.0
    %334 = vmatpush2.msra.mxu0 0.0
    %335 = vmatprep.subr.mxu0 0.0
    %336 = vmatpush2.msra.mxu0 0.0
    %337 = vmatprep.subr.mxu0 0.0
    %338 = vmatpush2.msra.mxu0 0.0
    %339 = vmatprep.subr.mxu0 0.0
    %340 = vmatpush2.msra.mxu0 0.0
    %341 = vmatprep.subr.mxu0 0.0
    %342 = vmatpush2.msra.mxu0 0.0
    %343 = vmatprep.subr.mxu0 0.0
    %344 = vmatpush2.msra.mxu0 0.0
    %345 = vmatprep.subr.mxu0 0.0
    %346 = vmatpush2.msra.mxu0 0.0
    %347 = vmatprep.subr.mxu0 0.0
    %348 = vmatpush2.msra.mxu0 0.0
    %349 = vmatprep.subr.mxu0 0.0
    %350 = vmatpush2.msra.mxu0 0.0
    %351 = vmatprep.subr.mxu0 0.0
    %352 = vmatpush2.msra.mxu0 0.0
    %353 = vmatprep.mubr.f32.mxu0 0.0
    %354 = vmatmul.mubr.f32.gmra.mxu0 %v287
    %v355 = vpop.f32.mrf.mxu0
    %v356 = vadd.f32 0.0, %v355
    %v357 = vpop.f32.mrf.mxu0
    %v358 = vadd.f32 0.0, %v357
    %359 = vdwg.mxu0
    %v360 = vmul.f32 %v54, %v356
    %v361 = vmul.f32 %v55, %v358
    %v362 = vld [vmem:[#allocation2] sm:$0xff]
    %v363 = vld [vmem:[#allocation2 + $0x8] sm:$0xff]
    %v364 = vld [vmem:[#allocation2 + $0x10] sm:$0xff]
    %v365 = vld [vmem:[#allocation2 + $0x18] sm:$0xff]
    %v366 = vld [vmem:[#allocation2 + $0x20] sm:$0xff]
    %v367 = vld [vmem:[#allocation2 + $0x28] sm:$0xff]
    %v368 = vld [vmem:[#allocation2 + $0x30] sm:$0xff]
    %v369 = vld [vmem:[#allocation2 + $0x38] sm:$0xff]
    %v370 = vld [vmem:[#allocation2 + $0x40] sm:$0xff]
    %v371 = vld [vmem:[#allocation2 + $0x48] sm:$0xff]
    %v372 = vld [vmem:[#allocation2 + $0x50] sm:$0xff]
    %v373 = vld [vmem:[#allocation2 + $0x58] sm:$0xff]
    %v374 = vld [vmem:[#allocation2 + $0x60] sm:$0xff]
    %v375 = vld [vmem:[#allocation2 + $0x68] sm:$0xff]
    %v376 = vld [vmem:[#allocation2 + $0x70] sm:$0xff]
    %v377 = vld [vmem:[#allocation2 + $0x78] sm:$0xff]
    %v378 = vld [vmem:[#allocation2 + $0x80] sm:$0xff]
    %v379 = vld [vmem:[#allocation2 + $0x88] sm:$0xff]
    %v380 = vld [vmem:[#allocation2 + $0x90] sm:$0xff]
    %v381 = vld [vmem:[#allocation2 + $0x98] sm:$0xff]
    %v382 = vld [vmem:[#allocation2 + $0xa0] sm:$0xff]
    %v383 = vld [vmem:[#allocation2 + $0xa8] sm:$0xff]
    %v384 = vld [vmem:[#allocation2 + $0xb0] sm:$0xff]
    %v385 = vld [vmem:[#allocation2 + $0xb8] sm:$0xff]
    %v386 = vld [vmem:[#allocation2 + $0xc0] sm:$0xff]
    %v387 = vld [vmem:[#allocation2 + $0xc8] sm:$0xff]
    %v388 = vld [vmem:[#allocation2 + $0xd0] sm:$0xff]
    %v389 = vld [vmem:[#allocation2 + $0xd8] sm:$0xff]
    %v390 = vld [vmem:[#allocation2 + $0xe0] sm:$0xff]
    %v391 = vld [vmem:[#allocation2 + $0xe8] sm:$0xff]
    %v392 = vld [vmem:[#allocation2 + $0xf0] sm:$0xff]
    %v393 = vld [vmem:[#allocation2 + $0xf8] sm:$0xff]
    %394 = vmatprep.subr.mxu0 0.0
    %395 = vmatpush1.msra.mxu0 %v377
    %396 = vmatprep.subr.mxu0 0.0
    %397 = vmatpush1.msra.mxu0 %v376
    %398 = vmatprep.subr.mxu0 0.0
    %399 = vmatpush1.msra.mxu0 %v375
    %400 = vmatprep.subr.mxu0 0.0
    %401 = vmatpush1.msra.mxu0 %v374
    %402 = vmatprep.subr.mxu0 0.0
    %403 = vmatpush1.msra.mxu0 %v373
    %404 = vmatprep.subr.mxu0 0.0
    %405 = vmatpush1.msra.mxu0 %v372
    %406 = vmatprep.subr.mxu0 0.0
    %407 = vmatpush1.msra.mxu0 %v371
    %408 = vmatprep.subr.mxu0 0.0
    %409 = vmatpush1.msra.mxu0 %v370
    %410 = vmatprep.subr.mxu0 0.0
    %411 = vmatpush1.msra.mxu0 %v369
    %412 = vmatprep.subr.mxu0 0.0
    %413 = vmatpush1.msra.mxu0 %v368
    %414 = vmatprep.subr.mxu0 0.0
    %415 = vmatpush1.msra.mxu0 %v367
    %416 = vmatprep.subr.mxu0 0.0
    %417 = vmatpush1.msra.mxu0 %v366
    %418 = vmatprep.subr.mxu0 0.0
    %419 = vmatpush1.msra.mxu0 %v365
    %420 = vmatprep.subr.mxu0 0.0
    %421 = vmatpush1.msra.mxu0 %v364
    %422 = vmatprep.subr.mxu0 0.0
    %423 = vmatpush1.msra.mxu0 %v363
    %424 = vmatprep.subr.mxu0 0.0
    %425 = vmatpush1.msra.mxu0 %v362
    %426 = vmatprep.subr.mxu0 0.0
    %427 = vmatpush2.msra.mxu0 %v393
    %428 = vmatprep.subr.mxu0 0.0
    %429 = vmatpush2.msra.mxu0 %v392
    %430 = vmatprep.subr.mxu0 0.0
    %431 = vmatpush2.msra.mxu0 %v391
    %432 = vmatprep.subr.mxu0 0.0
    %433 = vmatpush2.msra.mxu0 %v390
    %434 = vmatprep.subr.mxu0 0.0
    %435 = vmatpush2.msra.mxu0 %v389
    %436 = vmatprep.subr.mxu0 0.0
    %437 = vmatpush2.msra.mxu0 %v388
    %438 = vmatprep.subr.mxu0 0.0
    %439 = vmatpush2.msra.mxu0 %v387
    %440 = vmatprep.subr.mxu0 0.0
    %441 = vmatpush2.msra.mxu0 %v386
    %442 = vmatprep.subr.mxu0 0.0
    %443 = vmatpush2.msra.mxu0 %v385
    %444 = vmatprep.subr.mxu0 0.0
    %445 = vmatpush2.msra.mxu0 %v384
    %446 = vmatprep.subr.mxu0 0.0
    %447 = vmatpush2.msra.mxu0 %v383
    %448 = vmatprep.subr.mxu0 0.0
    %449 = vmatpush2.msra.mxu0 %v382
    %450 = vmatprep.subr.mxu0 0.0
    %451 = vmatpush2.msra.mxu0 %v381
    %452 = vmatprep.subr.mxu0 0.0
    %453 = vmatpush2.msra.mxu0 %v380
    %454 = vmatprep.subr.mxu0 0.0
    %455 = vmatpush2.msra.mxu0 %v379
    %456 = vmatprep.subr.mxu0 0.0
    %457 = vmatpush2.msra.mxu0 %v378
    %458 = vmatprep.mubr.f32.mxu0 %v361
    %459 = vmatmul.mubr.f32.gmra.mxu0 %v360
    %v460 = vpop.f32.mrf.mxu0
    %v461 = vadd.f32 0.0, %v460
    %v462 = vpop.f32.mrf.mxu0
    %463 = vdwg.mxu0
    %v464 = vmul.f32 %v54, %v54
    %v465 = vmul.f32 %v55, %v55
    %466 = vmatprep.subr.mxu0 0.0
    %467 = vmatpush1.msra.mxu0 %v377
    %468 = vmatprep.subr.mxu0 0.0
    %469 = vmatpush1.msra.mxu0 %v376
    %470 = vmatprep.subr.mxu0 0.0
    %471 = vmatpush1.msra.mxu0 %v375
    %472 = vmatprep.subr.mxu0 0.0
    %473 = vmatpush1.msra.mxu0 %v374
    %474 = vmatprep.subr.mxu0 0.0
    %475 = vmatpush1.msra.mxu0 %v373
    %476 = vmatprep.subr.mxu0 0.0
    %477 = vmatpush1.msra.mxu0 %v372
    %478 = vmatprep.subr.mxu0 0.0
    %479 = vmatpush1.msra.mxu0 %v371
    %480 = vmatprep.subr.mxu0 0.0
    %481 = vmatpush1.msra.mxu0 %v370
    %482 = vmatprep.subr.mxu0 0.0
    %483 = vmatpush1.msra.mxu0 %v369
    %484 = vmatprep.subr.mxu0 0.0
    %485 = vmatpush1.msra.mxu0 %v368
    %486 = vmatprep.subr.mxu0 0.0
    %487 = vmatpush1.msra.mxu0 %v367
    %488 = vmatprep.subr.mxu0 0.0
    %489 = vmatpush1.msra.mxu0 %v366
    %490 = vmatprep.subr.mxu0 0.0
    %491 = vmatpush1.msra.mxu0 %v365
    %492 = vmatprep.subr.mxu0 0.0
    %493 = vmatpush1.msra.mxu0 %v364
    %494 = vmatprep.subr.mxu0 0.0
    %495 = vmatpush1.msra.mxu0 %v363
    %496 = vmatprep.subr.mxu0 0.0
    %497 = vmatpush1.msra.mxu0 %v362
    %498 = vmatprep.subr.mxu0 0.0
    %499 = vmatpush2.msra.mxu0 %v393
    %500 = vmatprep.subr.mxu0 0.0
    %501 = vmatpush2.msra.mxu0 %v392
    %502 = vmatprep.subr.mxu0 0.0
    %503 = vmatpush2.msra.mxu0 %v391
    %504 = vmatprep.subr.mxu0 0.0
    %505 = vmatpush2.msra.mxu0 %v390
    %506 = vmatprep.subr.mxu0 0.0
    %507 = vmatpush2.msra.mxu0 %v389
    %508 = vmatprep.subr.mxu0 0.0
    %509 = vmatpush2.msra.mxu0 %v388
    %510 = vmatprep.subr.mxu0 0.0
    %511 = vmatpush2.msra.mxu0 %v387
    %512 = vmatprep.subr.mxu0 0.0
    %513 = vmatpush2.msra.mxu0 %v386
    %514 = vmatprep.subr.mxu0 0.0
    %515 = vmatpush2.msra.mxu0 %v385
    %516 = vmatprep.subr.mxu0 0.0
    %517 = vmatpush2.msra.mxu0 %v384
    %518 = vmatprep.subr.mxu0 0.0
    %519 = vmatpush2.msra.mxu0 %v383
    %520 = vmatprep.subr.mxu0 0.0
    %521 = vmatpush2.msra.mxu0 %v382
    %522 = vmatprep.subr.mxu0 0.0
    %523 = vmatpush2.msra.mxu0 %v381
    %524 = vmatprep.subr.mxu0 0.0
    %525 = vmatpush2.msra.mxu0 %v380
    %526 = vmatprep.subr.mxu0 0.0
    %527 = vmatpush2.msra.mxu0 %v379
    %528 = vmatprep.subr.mxu0 0.0
    %529 = vmatpush2.msra.mxu0 %v378
    %530 = vmatprep.mubr.f32.mxu0 %v465
    %531 = vmatmul.mubr.f32.gmra.mxu0 %v464
    %v532 = vpop.f32.mrf.mxu0
    %v533 = vadd.f32 0.0, %v532
    %v534 = vpop.f32.mrf.mxu0
    %535 = vdwg.mxu0
    %v536 = vmul.f32 %v356, %v356
    %v537 = vmul.f32 %v358, %v358
    %538 = vmatprep.subr.mxu0 0.0
    %539 = vmatpush1.msra.mxu0 %v377
    %540 = vmatprep.subr.mxu0 0.0
    %541 = vmatpush1.msra.mxu0 %v376
    %542 = vmatprep.subr.mxu0 0.0
    %543 = vmatpush1.msra.mxu0 %v375
    %544 = vmatprep.subr.mxu0 0.0
    %545 = vmatpush1.msra.mxu0 %v374
    %546 = vmatprep.subr.mxu0 0.0
    %547 = vmatpush1.msra.mxu0 %v373
    %548 = vmatprep.subr.mxu0 0.0
    %549 = vmatpush1.msra.mxu0 %v372
    %550 = vmatprep.subr.mxu0 0.0
    %551 = vmatpush1.msra.mxu0 %v371
    %552 = vmatprep.subr.mxu0 0.0
    %553 = vmatpush1.msra.mxu0 %v370
    %554 = vmatprep.subr.mxu0 0.0
    %555 = vmatpush1.msra.mxu0 %v369
    %556 = vmatprep.subr.mxu0 0.0
    %557 = vmatpush1.msra.mxu0 %v368
    %558 = vmatprep.subr.mxu0 0.0
    %559 = vmatpush1.msra.mxu0 %v367
    %560 = vmatprep.subr.mxu0 0.0
    %561 = vmatpush1.msra.mxu0 %v366
    %562 = vmatprep.subr.mxu0 0.0
    %563 = vmatpush1.msra.mxu0 %v365
    %564 = vmatprep.subr.mxu0 0.0
    %565 = vmatpush1.msra.mxu0 %v364
    %566 = vmatprep.subr.mxu0 0.0
    %567 = vmatpush1.msra.mxu0 %v363
    %568 = vmatprep.subr.mxu0 0.0
    %569 = vmatpush1.msra.mxu0 %v362
    %570 = vmatprep.subr.mxu0 0.0
    %571 = vmatpush2.msra.mxu0 %v393
    %572 = vmatprep.subr.mxu0 0.0
    %573 = vmatpush2.msra.mxu0 %v392
    %574 = vmatprep.subr.mxu0 0.0
    %575 = vmatpush2.msra.mxu0 %v391
    %576 = vmatprep.subr.mxu0 0.0
    %577 = vmatpush2.msra.mxu0 %v390
    %578 = vmatprep.subr.mxu0 0.0
    %579 = vmatpush2.msra.mxu0 %v389
    %580 = vmatprep.subr.mxu0 0.0
    %581 = vmatpush2.msra.mxu0 %v388
    %582 = vmatprep.subr.mxu0 0.0
    %583 = vmatpush2.msra.mxu0 %v387
    %584 = vmatprep.subr.mxu0 0.0
    %585 = vmatpush2.msra.mxu0 %v386
    %586 = vmatprep.subr.mxu0 0.0
    %587 = vmatpush2.msra.mxu0 %v385
    %588 = vmatprep.subr.mxu0 0.0
    %589 = vmatpush2.msra.mxu0 %v384
    %590 = vmatprep.subr.mxu0 0.0
    %591 = vmatpush2.msra.mxu0 %v383
    %592 = vmatprep.subr.mxu0 0.0
    %593 = vmatpush2.msra.mxu0 %v382
    %594 = vmatprep.subr.mxu0 0.0
    %595 = vmatpush2.msra.mxu0 %v381
    %596 = vmatprep.subr.mxu0 0.0
    %597 = vmatpush2.msra.mxu0 %v380
    %598 = vmatprep.subr.mxu0 0.0
    %599 = vmatpush2.msra.mxu0 %v379
    %600 = vmatprep.subr.mxu0 0.0
    %601 = vmatpush2.msra.mxu0 %v378
    %602 = vmatprep.mubr.f32.mxu0 %v537
    %603 = vmatmul.mubr.f32.gmra.mxu0 %v536
    %v604 = vpop.f32.mrf.mxu0
    %v605 = vadd.f32 0.0, %v604
    %v606 = vpop.f32.mrf.mxu0
    %607 = vdwg.mxu0
    %v608 = vmul.f32 %v533, %v605
    %v609 = vmax.f32 %v608, 1e-16
    %v610 = vrsqrt.pop %v609
    %v611 = vmul.f32 %v461, %v610
    %v612 = vld [vmem:[%s10] sm:$0x1]
    %v614 = vlaneseq
    %v615 = vshrl.u32 %v614, 7
    %v616 = vsub.s32 0, %v615
    %v617 = vrot.slane %v612, %v616
    %v619 = vadd.f32 %v611, %v617
    %620 = vmax.xlane.f32.xlu0 %v619
    %v621 = vpop.xlane.xlu0 %620
    %v622 = vsub.f32 %v619, %v621
    %v623 = vmul.f32 %v622, 1.442695
    %v624 = vpow.pop %v623
    %625 = vadd.xlane.f32.xlu0 %v624
    %v626 = vpop.xlane.xlu0 %625
    %v627 = vrcp.pop %v626
    %v628 = vmul.f32 %v624, %v627
    %vm629 = vcmask 64512
    %630 = vst.msk [vmem:[#allocation5] sm:$0xff] %vm629, %v628
    // Predicated region
    $region50: #{tpu_custom_call.1} parent=1 // pred_check
      _
    $region51: #{tpu_custom_call.1} parent=1 // pred_check_branch
      %632 = sbr.rel (0) target = $region53
    $region52: #{tpu_custom_call.1} parent=1 // pred_region
      %s634 = ssub.s32 128, 128
      %635 = vsyncadd [#allocation4], %s634
      %s637 = sshll.u32 [#allocation5], 4
      %s638 = int_to_ptr.vmem [resolvable:$true] %s637
      %640 = dma.vmem_to_hbm [thread:$0]  %s638, 128, %s11, [#allocation4]
    $region53: #{tpu_custom_call.1} parent=1 // pred_fallthru
      _
    // Predicated region
    $region54: #{tpu_custom_call.1} parent=1 // pred_check
      _
    $region55: #{tpu_custom_call.1} parent=1 // pred_check_branch
      %642 = sbr.rel (0) target = $region57
    $region56: #{tpu_custom_call.1} parent=1 // pred_region
      %643 = dma.done [#allocation4], 128
    $region57: #{tpu_custom_call.1} parent=1 // pred_fallthru
      _
    %644 = vsyncpa [#allocation3], 1
    %645 = vsyncpa [#allocation4], 1

</llo_original>
